<compile_context>
chip_gen: v7x
topology: tpu7x:2x2x1
jax: 0.10.0
libtpu: 0.0.40
codegen_flags: <defaults>
</compile_context>

<pallas_src>
import functools

import jax
import jax.numpy as jnp
from jax.experimental import pallas as pl
from jax.experimental.pallas import tpu as pltpu


def _round_up(x, m):
    return ((x + m - 1) // m) * m


def mlp_kernel(x_ref, w1_ref, b1_ref, w2_ref, b2_ref, o_ref, acc_ref):
    h_idx = pl.program_id(1)

    @pl.when(h_idx == 0)
    def _init():
        acc_ref[...] = jnp.zeros_like(acc_ref)

    # Layer 1 tile: (tB, In) @ (In, tH) on the MXU, f32 result.
    h = jnp.dot(x_ref[...], w1_ref[...], preferred_element_type=jnp.float32)
    # Bias + ReLU in f32 on the VPU (v5e has no bf16 VALU), per hidden tile.
    h = jnp.maximum(h + b1_ref[...], 0.0)

    # Layer 2 partial: (tB, tH) @ (tH, Out), accumulated in f32 scratch.
    acc_ref[...] += jnp.dot(h.astype(w2_ref.dtype), w2_ref[...],
                            preferred_element_type=jnp.float32)

    @pl.when(h_idx == pl.num_programs(1) - 1)
    def _finalize():
        o_ref[...] = (acc_ref[...] + b2_ref[...]).astype(o_ref.dtype)


@functools.partial(jax.jit, static_argnames=("compute_dtype", "tile_h", "tile_b"))
def mlp_forward(x, w1, b1, w2, b2, *, compute_dtype=jnp.bfloat16,
                tile_h=None, tile_b=128):
    """Fused Linear -> ReLU -> Linear.

    x:  (B, In)
    w1: (In, H)   b1: (1, H)
    w2: (H, Out)  b2: (1, Out)
    returns (B, Out) in x.dtype
    """
    B, In = x.shape
    In_w, H = w1.shape
    H_w, Out = w2.shape
    assert In_w == In and H_w == H
    out_dtype = x.dtype
    cbytes = jnp.dtype(compute_dtype).itemsize
    obytes = jnp.dtype(out_dtype).itemsize

    # ---- TPU-friendly padded shapes (sublane=8, lane=128 dense) ----
    B_p0 = _round_up(B, 8)
    tB = min(tile_b, B_p0)
    B_p = _round_up(B_p0, tB)

    In_p = _round_up(In, 8)
    Out_p = _round_up(Out, 128)

    # Auto-size the hidden tile: largest multiple of 128 whose double-buffered
    # streamed weight tiles fit a ~16 MiB budget (capped at 4096 / H itself).
    H_p128 = _round_up(H, 128)
    weight_budget = 16 << 20
    denom = 2 * (In_p + Out_p + 1) * cbytes          # w1 + w2 + b1 per hidden col, x2 bufs
    tH_cap = max(128, (weight_budget // denom) // 128 * 128)
    tH = tile_h if tile_h is not None else 4096
    tH = max(128, min(tH, tH_cap, H_p128) // 128 * 128)
    H_p = _round_up(H, tH)

    def pad2(a, rows, cols, dtype):
        a = a.astype(dtype)
        return jnp.pad(a, ((0, rows - a.shape[0]), (0, cols - a.shape[1])))

    # Matmul operands in bf16; biases stay f32 (accumulation/ReLU in f32).
    xc = pad2(x, B_p, In_p, compute_dtype)
    w1c = pad2(w1, In_p, H_p, compute_dtype)
    b1c = pad2(b1, 1, H_p, jnp.float32)
    w2c = pad2(w2, H_p, Out_p, compute_dtype)
    b2c = pad2(b2, 1, Out_p, jnp.float32)

    grid = (B_p // tB, H_p // tH)

    # ---- VMEM budget from actual tile sizes (double-buffered) + slack ----
    per_iter = (tB * In_p * cbytes          # x tile
                + In_p * tH * cbytes        # w1 tile
                + tH * 4                    # b1 tile
                + tH * Out_p * cbytes       # w2 tile
                + Out_p * 4                 # b2 tile
                + tB * Out_p * obytes)      # out tile
    vmem_needed = 2 * per_iter + tB * Out_p * 4     # 2 buffers + f32 accumulator
    # >=16 MiB floor, ~3x slack, capped at 48 MiB (headroom on v7x's 64 MiB).
    vmem_limit = int(min(max(3 * vmem_needed, 16 << 20), 48 << 20))

    cost = pl.CostEstimate(
        flops=2 * B_p * In_p * H_p + 2 * B_p * H_p * Out_p,
        transcendentals=0,
        bytes_accessed=(xc.size * cbytes + w1c.size * cbytes + w2c.size * cbytes
                        + b1c.size * 4 + b2c.size * 4 + B_p * Out_p * obytes),
    )

    out_padded = pl.pallas_call(
        mlp_kernel,
        out_shape=jax.ShapeDtypeStruct((B_p, Out_p), out_dtype),
        grid_spec=pltpu.PrefetchScalarGridSpec(
            num_scalar_prefetch=0,
            grid=grid,
            in_specs=[
                pl.BlockSpec((tB, In_p), lambda i, h: (i, 0)),
                pl.BlockSpec((In_p, tH), lambda i, h: (0, h)),
                pl.BlockSpec((1, tH), lambda i, h: (0, h)),
                pl.BlockSpec((tH, Out_p), lambda i, h: (h, 0)),
                pl.BlockSpec((1, Out_p), lambda i, h: (0, 0)),
            ],
            out_specs=pl.BlockSpec((tB, Out_p), lambda i, h: (i, 0)),
            scratch_shapes=[pltpu.VMEM((tB, Out_p), jnp.float32)],
        ),
        compiler_params=pltpu.CompilerParams(
            dimension_semantics=("parallel", "arbitrary"),
            vmem_limit_bytes=vmem_limit,
        ),
        cost_estimate=cost,
    )(xc, w1c, b1c, w2c, b2c)

    return out_padded[:B, :Out]


def make_params(key, input_size, output_size, dtype=jnp.float32):
    """Deterministic PyTorch-style (uniform) init for the two Linear layers."""
    hidden_size = input_size * 100
    k1, k2, k3, k4 = jax.random.split(key, 4)

    bound1 = 1.0 / (input_size ** 0.5)
    # PyTorch stores Linear weight as (out, in); we keep (in, out) for the kernel.
    w1 = jax.random.uniform(k1, (input_size, hidden_size), dtype,
                            minval=-bound1, maxval=bound1)
    b1 = jax.random.uniform(k2, (1, hidden_size), dtype,
                            minval=-bound1, maxval=bound1)

    bound2 = 1.0 / (hidden_size ** 0.5)
    w2 = jax.random.uniform(k3, (hidden_size, output_size), dtype,
                            minval=-bound2, maxval=bound2)
    b2 = jax.random.uniform(k4, (1, output_size), dtype,
                            minval=-bound2, maxval=bound2)
    return w1, b1, w2, b2


if __name__ == "__main__":
    key = jax.random.PRNGKey(0)
    kx, kp = jax.random.split(key)

    batch = 2
    input_size = 8          # -> hidden = 800
    output_size = 4

    x = jax.random.normal(kx, (batch, input_size), jnp.float32)
    w1, b1, w2, b2 = make_params(kp, input_size, output_size)

    out = mlp_forward(x, w1, b1, w2, b2)
    out = jax.block_until_ready(out)
    assert out.shape == (batch, output_size)

    # Reference with matching compute precision (bf16 matmuls, f32 accumulation).
    xb, w1b, w2b = (a.astype(jnp.bfloat16) for a in (x, w1, w2))
    h_ref = jnp.maximum(
        jnp.dot(xb, w1b, preferred_element_type=jnp.float32) + b1, 0.0)
    ref = jnp.dot(h_ref.astype(jnp.bfloat16), w2b,
                  preferred_element_type=jnp.float32) + b2
    assert jnp.allclose(out.astype(jnp.float32), ref, atol=1e-2, rtol=1e-2)

    # Loose sanity check against the full-f32 reference (semantics preserved).
    ref32 = jnp.maximum(x @ w1 + b1, 0.0) @ w2 + b2
    assert jnp.allclose(out.astype(jnp.float32), ref32, atol=5e-2, rtol=5e-2)

    print("KERNEL_OK")
</pallas_src>

<mosaic_0001>
module attributes {stable_mosaic.version = 11 : i64} {
  func.func @mlp_kernel(%arg0: i32, %arg1: i32, %arg2: memref<8x8xbf16, #tpu.memory_space<vmem>>, %arg3: memref<8x896xbf16, #tpu.memory_space<vmem>>, %arg4: memref<1x896xf32, #tpu.memory_space<vmem>>, %arg5: memref<896x128xbf16, #tpu.memory_space<vmem>>, %arg6: memref<1x128xf32, #tpu.memory_space<vmem>>, %arg7: memref<8x128xf32, #tpu.memory_space<vmem>>, %arg8: memref<8x128xf32, #tpu.memory_space<vmem>>) attributes {dimension_semantics = [#tpu.dimension_semantics<parallel>, #tpu.dimension_semantics<arbitrary>], iteration_bounds = array<i64: 1, 1>, scalar_prefetch = 0 : i64, scratch_operands = 1 : i64, tpu.core_type = #tpu.core_type<tc>, window_params = [{transform_indices = @transform_0, window_bounds = array<i64: 8, 8>}, {transform_indices = @transform_1, window_bounds = array<i64: 8, 896>}, {transform_indices = @transform_2, window_bounds = array<i64: 1, 896>}, {transform_indices = @transform_3, window_bounds = array<i64: 896, 128>}, {pipeline_mode = #tpu.pipeline_mode<synchronous>, transform_indices = @transform_4, window_bounds = array<i64: 1, 128>}, {transform_indices = @transform_5, window_bounds = array<i64: 8, 128>}]} {
    %c0_i32 = arith.constant 0 : i32
    %0 = arith.cmpi eq, %arg1, %c0_i32 : i32
    %1 = arith.extui %0 : i1 to i32
    %c0_i32_0 = arith.constant 0 : i32
    %2 = arith.cmpi ne, %1, %c0_i32_0 : i32
    scf.if %2 {
      %cst_16 = arith.constant 0.000000e+00 : f32
      %20 = vector.broadcast %cst_16 : f32 to vector<8x128xf32>
      %c0_17 = arith.constant 0 : index
      %c0_18 = arith.constant 0 : index
      %21 = vector.load %arg8[%c0_17, %c0_18] : memref<8x128xf32, #tpu.memory_space<vmem>>, vector<8x128xf32>
      tpu.vector_store %arg8[%c0_17, %c0_18], %20 {strides = array<i32>} : memref<8x128xf32, #tpu.memory_space<vmem>>, vector<8x128xf32>,
    } else {
    }
    %c0 = arith.constant 0 : index
    %c0_1 = arith.constant 0 : index
    %3 = vector.load %arg2[%c0, %c0_1] : memref<8x8xbf16, #tpu.memory_space<vmem>>, vector<8x8xbf16>
    %c0_2 = arith.constant 0 : index
    %c0_3 = arith.constant 0 : index
    %4 = vector.load %arg3[%c0_2, %c0_3] : memref<8x896xbf16, #tpu.memory_space<vmem>>, vector<8x896xbf16>
    %cst = arith.constant dense<0.000000e+00> : vector<8x896xf32>
    %5 = tpu.matmul %3, %4, %cst {dimension_numbers = #tpu.dot_dimension_numbers<[1], [0], [0], [1], [0, 0, 1, 1], [], []>} : vector<8x8xbf16>, vector<8x896xbf16>, vector<8x896xf32> -> vector<8x896xf32>
    %c0_4 = arith.constant 0 : index
    %c0_5 = arith.constant 0 : index
    %6 = vector.load %arg4[%c0_4, %c0_5] : memref<1x896xf32, #tpu.memory_space<vmem>>, vector<1x896xf32>
    %7 = vector.broadcast %6 : vector<1x896xf32> to vector<8x896xf32>
    %8 = arith.addf %5, %7 : vector<8x896xf32>
    %cst_6 = arith.constant 0.000000e+00 : f32
    %9 = vector.broadcast %cst_6 : f32 to vector<8x896xf32>
    %10 = arith.maximumf %8, %9 : vector<8x896xf32>
    %c0_7 = arith.constant 0 : index
    %c0_8 = arith.constant 0 : index
    %11 = vector.load %arg8[%c0_7, %c0_8] : memref<8x128xf32, #tpu.memory_space<vmem>>, vector<8x128xf32>
    %12 = arith.truncf %10 : vector<8x896xf32> to vector<8x896xbf16>
    %c0_9 = arith.constant 0 : index
    %c0_10 = arith.constant 0 : index
    %13 = vector.load %arg5[%c0_9, %c0_10] : memref<896x128xbf16, #tpu.memory_space<vmem>>, vector<896x128xbf16>
    %cst_11 = arith.constant dense<0.000000e+00> : vector<8x128xf32>
    %14 = tpu.matmul %12, %13, %cst_11 {dimension_numbers = #tpu.dot_dimension_numbers<[1], [0], [0], [1], [0, 0, 1, 1], [], []>} : vector<8x896xbf16>, vector<896x128xbf16>, vector<8x128xf32> -> vector<8x128xf32>
    %15 = arith.addf %11, %14 : vector<8x128xf32>
    %c0_12 = arith.constant 0 : index
    %c0_13 = arith.constant 0 : index
    %16 = vector.load %arg8[%c0_12, %c0_13] : memref<8x128xf32, #tpu.memory_space<vmem>>, vector<8x128xf32>
    tpu.vector_store %arg8[%c0_12, %c0_13], %15 {strides = array<i32>} : memref<8x128xf32, #tpu.memory_space<vmem>>, vector<8x128xf32>,
    %c0_i32_14 = arith.constant 0 : i32
    %17 = arith.cmpi eq, %arg1, %c0_i32_14 : i32
    %18 = arith.extui %17 : i1 to i32
    %c0_i32_15 = arith.constant 0 : i32
    %19 = arith.cmpi ne, %18, %c0_i32_15 : i32
    scf.if %19 {
      %c0_16 = arith.constant 0 : index
      %c0_17 = arith.constant 0 : index
      %20 = vector.load %arg8[%c0_16, %c0_17] : memref<8x128xf32, #tpu.memory_space<vmem>>, vector<8x128xf32>
      %c0_18 = arith.constant 0 : index
      %c0_19 = arith.constant 0 : index
      %21 = vector.load %arg6[%c0_18, %c0_19] : memref<1x128xf32, #tpu.memory_space<vmem>>, vector<1x128xf32>
      %22 = vector.broadcast %21 : vector<1x128xf32> to vector<8x128xf32>
      %23 = arith.addf %20, %22 : vector<8x128xf32>
      %c0_20 = arith.constant 0 : index
      %c0_21 = arith.constant 0 : index
      %24 = vector.load %arg7[%c0_20, %c0_21] : memref<8x128xf32, #tpu.memory_space<vmem>>, vector<8x128xf32>
      tpu.vector_store %arg7[%c0_20, %c0_21], %23 {strides = array<i32>} : memref<8x128xf32, #tpu.memory_space<vmem>>, vector<8x128xf32>,
    } else {
    }
    return
  }
  func.func @transform_0(%arg0: i32, %arg1: i32) -> (i32, i32) {
    %c0_i32 = arith.constant 0 : i32
    %c0_i32_0 = arith.constant 0 : i32
    return %arg0, %c0_i32 : i32, i32
  }
  func.func @transform_1(%arg0: i32, %arg1: i32) -> (i32, i32) {
    %c0_i32 = arith.constant 0 : i32
    %c0_i32_0 = arith.constant 0 : i32
    return %c0_i32, %arg1 : i32, i32
  }
  func.func @transform_2(%arg0: i32, %arg1: i32) -> (i32, i32) {
    %c0_i32 = arith.constant 0 : i32
    %c0_i32_0 = arith.constant 0 : i32
    return %c0_i32, %arg1 : i32, i32
  }
  func.func @transform_3(%arg0: i32, %arg1: i32) -> (i32, i32) {
    %c0_i32 = arith.constant 0 : i32
    %c0_i32_0 = arith.constant 0 : i32
    return %arg1, %c0_i32 : i32, i32
  }
  func.func @transform_4(%arg0: i32, %arg1: i32) -> (i32, i32) {
    %c0_i32 = arith.constant 0 : i32
    %c0_i32_0 = arith.constant 0 : i32
    %c0_i32_1 = arith.constant 0 : i32
    return %c0_i32, %c0_i32_0 : i32, i32
  }
  func.func @transform_5(%arg0: i32, %arg1: i32) -> (i32, i32) {
    %c0_i32 = arith.constant 0 : i32
    %c0_i32_0 = arith.constant 0 : i32
    return %arg0, %c0_i32 : i32, i32
  }
}

</mosaic_0001>

<llo_original>
// kernel: mlp_forward.1
$region0: #{mlp_forward.1}
  #allocation0 [shape = 'u32[]', space=smem, size = 0x4, offset = 0x4, fixed_abs, tag = 'smem constant byte address 0x4 - core index']
  #allocation1 [shape = 'u32[144,128]{1,0:T(1,128)}', space=vmem, size = 0x12000, scoped, tag = 'internal scratch']
  #allocation2 [shape = 'f32[8,128]{1,0:T(8,128)}', space=vmem, size = 0x1000, scoped, tag = 'scratch operand']
  %s0 = inlined_call_operand.vmem [shape: bf16[8,8], index: 0, kind: input, shape index: {}]
  %s1 = inlined_call_operand.vmem [shape: bf16[8,896], index: 1, kind: input, shape index: {}]
  %s2 = inlined_call_operand.vmem [shape: f32[1,896], index: 2, kind: input, shape index: {}]
  %s3 = inlined_call_operand.vmem [shape: bf16[896,128], index: 3, kind: input, shape index: {}]
  %s4 = inlined_call_operand.vmem [shape: f32[1,128], index: 4, kind: input, shape index: {}]
  %s5 = inlined_call_operand.vmem [shape: f32[8,128], index: 5, kind: output, shape index: {}]
  %s6 = sld [smem:[#allocation0]]
  $region38: #{mlp_forward.1} parent=0
    _
  %s8 = ssub.s32 1, %s6
  %s9 = scalar_select 0, %s8, %s6
  // Predicated region
  $region2: #{mlp_forward.1} parent=0 // pred_check
    _
  $region3: #{mlp_forward.1} parent=0 // pred_check_branch
    %11 = sbr.rel (0) target = $region5
  $region4: #{mlp_forward.1} parent=0 // pred_region
    _
  $region5: #{mlp_forward.1} parent=0 // pred_fallthru
    _
  // Predicated region
  $region6: #{mlp_forward.1} parent=0 // pred_check
    _
  $region7: #{mlp_forward.1} parent=0 // pred_check_branch
    %13 = sbr.rel (0) target = $region9
  $region8: #{mlp_forward.1} parent=0 // pred_region
    _
  $region9: #{mlp_forward.1} parent=0 // pred_fallthru
    _
  // Predicated region
  $region10: #{mlp_forward.1} parent=0 // pred_check
    _
  $region11: #{mlp_forward.1} parent=0 // pred_check_branch
    %15 = sbr.rel (0) target = $region13
  $region12: #{mlp_forward.1} parent=0 // pred_region
    _
  $region13: #{mlp_forward.1} parent=0 // pred_fallthru
    _
  // Predicated region
  $region14: #{mlp_forward.1} parent=0 // pred_check
    _
  $region15: #{mlp_forward.1} parent=0 // pred_check_branch
    %17 = sbr.rel (0) target = $region17
  $region16: #{mlp_forward.1} parent=0 // pred_region
    _
  $region17: #{mlp_forward.1} parent=0 // pred_fallthru
    _
  // Predicated region
  $region18: #{mlp_forward.1} parent=0 // pred_check
    _
  $region19: #{mlp_forward.1} parent=0 // pred_check_branch
    %19 = sbr.rel (0) target = $region21
  $region20: #{mlp_forward.1} parent=0 // pred_region
    _
  $region21: #{mlp_forward.1} parent=0 // pred_fallthru
    _
  %p21 = scmp.eq.s32.totalorder 0, 0
  // Predicated region
  $region22: #{mlp_forward.1} parent=0 // pred_check
    %p22 = pneg %p21
  $region23: #{mlp_forward.1} parent=0 // pred_check_branch
    %24 = sbr.rel (%p22) target = $region25
  $region24: #{mlp_forward.1} parent=0 // pred_region
    %25 = vst [vmem:[#allocation2] sm:$0xff] 0.0
  $region25: #{mlp_forward.1} parent=0 // pred_fallthru
    _
  %v26 = vld [vmem:[%s0] sm:$0xf]
  %v27 = vld [vmem:[%s1] sm:$0xff]
  %v28 = vld [vmem:[%s1 + $0x8] sm:$0xff]
  %v29 = vld [vmem:[%s1 + $0x10] sm:$0xff]
  %v30 = vld [vmem:[%s1 + $0x18] sm:$0xf]
  %v31 = vld [vmem:[%s2] sm:$0xff]
  %v33 = vlaneseq
  %v34 = vshrl.u32 %v33, 7
  %v35 = vsub.s32 0, %v34
  %v36 = vrot.slane %v31, %v35
  %v37 = vlaneseq
  %v38 = vshrl.u32 %v37, 7
  %v39 = vsub.s32 1, %v38
  %v40 = vrot.slane %v31, %v39
  %v41 = vlaneseq
  %v42 = vshrl.u32 %v41, 7
  %v43 = vsub.s32 2, %v42
  %v44 = vrot.slane %v31, %v43
  %v45 = vlaneseq
  %v46 = vshrl.u32 %v45, 7
  %v47 = vsub.s32 3, %v46
  %v48 = vrot.slane %v31, %v47
  %v49 = vlaneseq
  %v50 = vshrl.u32 %v49, 7
  %v51 = vsub.s32 4, %v50
  %v52 = vrot.slane %v31, %v51
  %v53 = vlaneseq
  %v54 = vshrl.u32 %v53, 7
  %v55 = vsub.s32 5, %v54
  %v56 = vrot.slane %v31, %v55
  %v57 = vlaneseq
  %v58 = vshrl.u32 %v57, 7
  %v59 = vsub.s32 6, %v58
  %v60 = vrot.slane %v31, %v59
  %v72 = vunpack.c.l.b16 %v27
  %v73 = vunpack.c.h.b16 %v27
  %v74 = vunpack.c.l.b16 %v28
  %v75 = vunpack.c.h.b16 %v28
  %v76 = vunpack.c.l.b16 %v29
  %v77 = vunpack.c.h.b16 %v29
  %v78 = vunpack.c.l.b16 %v30
  %v79 = vpack.c.b16 %v72, %v72
  %v80 = vpack.c.b16 %v73, %v73
  %v81 = vpack.c.b16 %v74, %v74
  %v82 = vpack.c.b16 %v75, %v75
  %v83 = vpack.c.b16 %v76, %v76
  %v84 = vpack.c.b16 %v77, %v77
  %v85 = vpack.c.b16 %v78, %v78
  %vm86 = vcmask 64512
  %v88 = vsel %vm86, %v26, 0
  %vm90 = vcmask 1043456
  %v92 = vsel %vm90, %v79, 0
  %v95 = vsel %vm90, %v80, 0
  %v98 = vsel %vm90, %v81, 0
  %v101 = vsel %vm90, %v82, 0
  %v104 = vsel %vm90, %v83, 0
  %v107 = vsel %vm90, %v84, 0
  %v110 = vsel %vm90, %v85, 0
  %112 = vmatprep.subr.bf16.mxu0 %v95
  %113 = vmatpush1.bf16.msra.mxu0 %v92
  %114 = vmatprep.subr.bf16.mxu0 0
  %115 = vmatpush1.bf16.msra.mxu0 0
  %116 = vmatprep.subr.bf16.mxu0 0
  %117 = vmatpush1.bf16.msra.mxu0 0
  %118 = vmatprep.subr.bf16.mxu0 0
  %119 = vmatpush1.bf16.msra.mxu0 0
  %120 = vmatprep.subr.bf16.mxu0 0
  %121 = vmatpush1.bf16.msra.mxu0 0
  %122 = vmatprep.subr.bf16.mxu0 0
  %123 = vmatpush1.bf16.msra.mxu0 0
  %124 = vmatprep.subr.bf16.mxu0 0
  %125 = vmatpush1.bf16.msra.mxu0 0
  %126 = vmatprep.subr.bf16.mxu0 0
  %127 = vmatpush1.bf16.msra.mxu0 0
  %128 = vmatprep.subr.bf16.mxu0 0
  %129 = vmatpush1.bf16.msra.mxu0 0
  %130 = vmatprep.subr.bf16.mxu0 0
  %131 = vmatpush1.bf16.msra.mxu0 0
  %132 = vmatprep.subr.bf16.mxu0 0
  %133 = vmatpush1.bf16.msra.mxu0 0
  %134 = vmatprep.subr.bf16.mxu0 0
  %135 = vmatpush1.bf16.msra.mxu0 0
  %136 = vmatprep.subr.bf16.mxu0 0
  %137 = vmatpush1.bf16.msra.mxu0 0
  %138 = vmatprep.subr.bf16.mxu0 0
  %139 = vmatpush1.bf16.msra.mxu0 0
  %140 = vmatprep.subr.bf16.mxu0 0
  %141 = vmatpush1.bf16.msra.mxu0 0
  %142 = vmatprep.subr.bf16.mxu0 0
  %143 = vmatpush1.bf16.msra.mxu0 0
  %144 = vmatprep.mubr.bf16.mxu0 0
  %145 = vmatmul.mubr.bf16.gmra.mrb[0].mxu0 %v88
  %v146 = vpop.f32.mrb[0].mxu0
  %v147 = vadd.f32 %v36, %v146
  %v148 = vpop.f32.mrb[0].mxu0
  %v149 = vadd.f32 %v40, %v148
  %v150 = vpop.f32.mrb[0].mxu0
  %v151 = vpop.f32.mrb[0].mxu0
  %152 = vdwg.mxu0
  %153 = vmatprep.subr.bf16.mxu0 %v101
  %154 = vmatpush1.bf16.msra.mxu0 %v98
  %155 = vmatprep.subr.bf16.mxu0 0
  %156 = vmatpush1.bf16.msra.mxu0 0
  %157 = vmatprep.subr.bf16.mxu0 0
  %158 = vmatpush1.bf16.msra.mxu0 0
  %159 = vmatprep.subr.bf16.mxu0 0
  %160 = vmatpush1.bf16.msra.mxu0 0
  %161 = vmatprep.subr.bf16.mxu0 0
  %162 = vmatpush1.bf16.msra.mxu0 0
  %163 = vmatprep.subr.bf16.mxu0 0
  %164 = vmatpush1.bf16.msra.mxu0 0
  %165 = vmatprep.subr.bf16.mxu0 0
  %166 = vmatpush1.bf16.msra.mxu0 0
  %167 = vmatprep.subr.bf16.mxu0 0
  %168 = vmatpush1.bf16.msra.mxu0 0
  %169 = vmatprep.subr.bf16.mxu0 0
  %170 = vmatpush1.bf16.msra.mxu0 0
  %171 = vmatprep.subr.bf16.mxu0 0
  %172 = vmatpush1.bf16.msra.mxu0 0
  %173 = vmatprep.subr.bf16.mxu0 0
  %174 = vmatpush1.bf16.msra.mxu0 0
  %175 = vmatprep.subr.bf16.mxu0 0
  %176 = vmatpush1.bf16.msra.mxu0 0
  %177 = vmatprep.subr.bf16.mxu0 0
  %178 = vmatpush1.bf16.msra.mxu0 0
  %179 = vmatprep.subr.bf16.mxu0 0
  %180 = vmatpush1.bf16.msra.mxu0 0
  %181 = vmatprep.subr.bf16.mxu0 0
  %182 = vmatpush1.bf16.msra.mxu0 0
  %183 = vmatprep.subr.bf16.mxu0 0
  %184 = vmatpush1.bf16.msra.mxu0 0
  %185 = vmatprep.mubr.bf16.mxu0 0
  %186 = vmatmul.mubr.bf16.gmra.mrb[0].mxu0 %v88
  %v187 = vpop.f32.mrb[0].mxu0
  %v188 = vadd.f32 %v44, %v187
  %v189 = vpop.f32.mrb[0].mxu0
  %v190 = vadd.f32 %v48, %v189
  %v191 = vpop.f32.mrb[0].mxu0
  %v192 = vpop.f32.mrb[0].mxu0
  %193 = vdwg.mxu0
  %194 = vmatprep.subr.bf16.mxu0 %v107
  %195 = vmatpush1.bf16.msra.mxu0 %v104
  %196 = vmatprep.subr.bf16.mxu0 0
  %197 = vmatpush1.bf16.msra.mxu0 0
  %198 = vmatprep.subr.bf16.mxu0 0
  %199 = vmatpush1.bf16.msra.mxu0 0
  %200 = vmatprep.subr.bf16.mxu0 0
  %201 = vmatpush1.bf16.msra.mxu0 0
  %202 = vmatprep.subr.bf16.mxu0 0
  %203 = vmatpush1.bf16.msra.mxu0 0
  %204 = vmatprep.subr.bf16.mxu0 0
  %205 = vmatpush1.bf16.msra.mxu0 0
  %206 = vmatprep.subr.bf16.mxu0 0
  %207 = vmatpush1.bf16.msra.mxu0 0
  %208 = vmatprep.subr.bf16.mxu0 0
  %209 = vmatpush1.bf16.msra.mxu0 0
  %210 = vmatprep.subr.bf16.mxu0 0
  %211 = vmatpush1.bf16.msra.mxu0 0
  %212 = vmatprep.subr.bf16.mxu0 0
  %213 = vmatpush1.bf16.msra.mxu0 0
  %214 = vmatprep.subr.bf16.mxu0 0
  %215 = vmatpush1.bf16.msra.mxu0 0
  %216 = vmatprep.subr.bf16.mxu0 0
  %217 = vmatpush1.bf16.msra.mxu0 0
  %218 = vmatprep.subr.bf16.mxu0 0
  %219 = vmatpush1.bf16.msra.mxu0 0
  %220 = vmatprep.subr.bf16.mxu0 0
  %221 = vmatpush1.bf16.msra.mxu0 0
  %222 = vmatprep.subr.bf16.mxu0 0
  %223 = vmatpush1.bf16.msra.mxu0 0
  %224 = vmatprep.subr.bf16.mxu0 0
  %225 = vmatpush1.bf16.msra.mxu0 0
  %226 = vmatprep.mubr.bf16.mxu0 0
  %227 = vmatmul.mubr.bf16.gmra.mrb[0].mxu0 %v88
  %v228 = vpop.f32.mrb[0].mxu0
  %v229 = vadd.f32 %v52, %v228
  %v230 = vpop.f32.mrb[0].mxu0
  %v231 = vadd.f32 %v56, %v230
  %v232 = vpop.f32.mrb[0].mxu0
  %v233 = vpop.f32.mrb[0].mxu0
  %234 = vdwg.mxu0
  %235 = vmatprep.subr.bf16.mxu0 0
  %236 = vmatpush1.bf16.msra.mxu0 %v110
  %237 = vmatprep.subr.bf16.mxu0 0
  %238 = vmatpush1.bf16.msra.mxu0 0
  %239 = vmatprep.subr.bf16.mxu0 0
  %240 = vmatpush1.bf16.msra.mxu0 0
  %241 = vmatprep.subr.bf16.mxu0 0
  %242 = vmatpush1.bf16.msra.mxu0 0
  %243 = vmatprep.subr.bf16.mxu0 0
  %244 = vmatpush1.bf16.msra.mxu0 0
  %245 = vmatprep.subr.bf16.mxu0 0
  %246 = vmatpush1.bf16.msra.mxu0 0
  %247 = vmatprep.subr.bf16.mxu0 0
  %248 = vmatpush1.bf16.msra.mxu0 0
  %249 = vmatprep.subr.bf16.mxu0 0
  %250 = vmatpush1.bf16.msra.mxu0 0
  %251 = vmatprep.subr.bf16.mxu0 0
  %252 = vmatpush1.bf16.msra.mxu0 0
  %253 = vmatprep.subr.bf16.mxu0 0
  %254 = vmatpush1.bf16.msra.mxu0 0
  %255 = vmatprep.subr.bf16.mxu0 0
  %256 = vmatpush1.bf16.msra.mxu0 0
  %257 = vmatprep.subr.bf16.mxu0 0
  %258 = vmatpush1.bf16.msra.mxu0 0
  %259 = vmatprep.subr.bf16.mxu0 0
  %260 = vmatpush1.bf16.msra.mxu0 0
  %261 = vmatprep.subr.bf16.mxu0 0
  %262 = vmatpush1.bf16.msra.mxu0 0
  %263 = vmatprep.subr.bf16.mxu0 0
  %264 = vmatpush1.bf16.msra.mxu0 0
  %265 = vmatprep.subr.bf16.mxu0 0
  %266 = vmatpush1.bf16.msra.mxu0 0
  %267 = vmatprep.mubr.bf16.mxu0 0
  %268 = vmatmul.mubr.bf16.gmra.mrb[0].mxu0 %v88
  %v269 = vpop.f32.mrb[0].mxu0
  %v270 = vadd.f32 %v60, %v269
  %v271 = vpop.f32.mrb[0].mxu0
  %v272 = vpop.f32.mrb[0].mxu0
  %v273 = vpop.f32.mrb[0].mxu0
  %274 = vdwg.mxu0
  %v275 = vmax.f32 %v147, 0.0
  %v276 = vmax.f32 %v149, 0.0
  %v277 = vmax.f32 %v188, 0.0
  %v278 = vmax.f32 %v190, 0.0
  %v279 = vmax.f32 %v229, 0.0
  %v280 = vmax.f32 %v231, 0.0
  %v281 = vmax.f32 %v270, 0.0
  %v282 = vld [vmem:[#allocation2] sm:$0xff]
  %v283 = vpack.c.bf16 %v275, %v275
  %v284 = vpack.c.bf16 %v276, %v276
  %v285 = vpack.c.bf16 %v277, %v277
  %v286 = vpack.c.bf16 %v278, %v278
  %v287 = vpack.c.bf16 %v279, %v279
  %v288 = vpack.c.bf16 %v280, %v280
  %v289 = vpack.c.bf16 %v281, %v281
  %v290 = vld [vmem:[%s3] sm:$0xf]
  %v291 = vld [vmem:[%s3 + $0x4] sm:$0xf]
  %v292 = vld [vmem:[%s3 + $0x8] sm:$0xf]
  %v293 = vld [vmem:[%s3 + $0xc] sm:$0xf]
  %v294 = vld [vmem:[%s3 + $0x10] sm:$0xf]
  %v295 = vld [vmem:[%s3 + $0x14] sm:$0xf]
  %v296 = vld [vmem:[%s3 + $0x18] sm:$0xf]
  %v297 = vld [vmem:[%s3 + $0x1c] sm:$0xf]
  %v298 = vld [vmem:[%s3 + $0x20] sm:$0xf]
  %v299 = vld [vmem:[%s3 + $0x24] sm:$0xf]
  %v300 = vld [vmem:[%s3 + $0x28] sm:$0xf]
  %v301 = vld [vmem:[%s3 + $0x2c] sm:$0xf]
  %v302 = vld [vmem:[%s3 + $0x30] sm:$0xf]
  %v303 = vld [vmem:[%s3 + $0x34] sm:$0xf]
  %v304 = vld [vmem:[%s3 + $0x38] sm:$0xf]
  %v305 = vld [vmem:[%s3 + $0x3c] sm:$0xf]
  %v306 = vld [vmem:[%s3 + $0x40] sm:$0xf]
  %v307 = vld [vmem:[%s3 + $0x44] sm:$0xf]
  %v308 = vld [vmem:[%s3 + $0x48] sm:$0xf]
  %v309 = vld [vmem:[%s3 + $0x4c] sm:$0xf]
  %v310 = vld [vmem:[%s3 + $0x50] sm:$0xf]
  %v311 = vld [vmem:[%s3 + $0x54] sm:$0xf]
  %v312 = vld [vmem:[%s3 + $0x58] sm:$0xf]
  %v313 = vld [vmem:[%s3 + $0x5c] sm:$0xf]
  %v314 = vld [vmem:[%s3 + $0x60] sm:$0xf]
  %v315 = vld [vmem:[%s3 + $0x64] sm:$0xf]
  %v316 = vld [vmem:[%s3 + $0x68] sm:$0xf]
  %v317 = vld [vmem:[%s3 + $0x6c] sm:$0xf]
  %v318 = vld [vmem:[%s3 + $0x70] sm:$0xf]
  %v319 = vld [vmem:[%s3 + $0x74] sm:$0xf]
  %v320 = vld [vmem:[%s3 + $0x78] sm:$0xf]
  %v321 = vld [vmem:[%s3 + $0x7c] sm:$0xf]
  %v322 = vld [vmem:[%s3 + $0x80] sm:$0xf]
  %v323 = vld [vmem:[%s3 + $0x84] sm:$0xf]
  %v324 = vld [vmem:[%s3 + $0x88] sm:$0xf]
  %v325 = vld [vmem:[%s3 + $0x8c] sm:$0xf]
  %v326 = vld [vmem:[%s3 + $0x90] sm:$0xf]
  %v327 = vld [vmem:[%s3 + $0x94] sm:$0xf]
  %v328 = vld [vmem:[%s3 + $0x98] sm:$0xf]
  %v329 = vld [vmem:[%s3 + $0x9c] sm:$0xf]
  %v330 = vld [vmem:[%s3 + $0xa0] sm:$0xf]
  %v331 = vld [vmem:[%s3 + $0xa4] sm:$0xf]
  %v332 = vld [vmem:[%s3 + $0xa8] sm:$0xf]
  %v333 = vld [vmem:[%s3 + $0xac] sm:$0xf]
  %v334 = vld [vmem:[%s3 + $0xb0] sm:$0xf]
  %v335 = vld [vmem:[%s3 + $0xb4] sm:$0xf]
  %v336 = vld [vmem:[%s3 + $0xb8] sm:$0xf]
  %v337 = vld [vmem:[%s3 + $0xbc] sm:$0xf]
  %v338 = vld [vmem:[%s3 + $0xc0] sm:$0xf]
  %v339 = vld [vmem:[%s3 + $0xc4] sm:$0xf]
  %v340 = vld [vmem:[%s3 + $0xc8] sm:$0xf]
  %v341 = vld [vmem:[%s3 + $0xcc] sm:$0xf]
  %v342 = vld [vmem:[%s3 + $0xd0] sm:$0xf]
  %v343 = vld [vmem:[%s3 + $0xd4] sm:$0xf]
  %v344 = vld [vmem:[%s3 + $0xd8] sm:$0xf]
  %v345 = vld [vmem:[%s3 + $0xdc] sm:$0xf]
  %v346 = vld [vmem:[%s3 + $0xe0] sm:$0xf]
  %v347 = vld [vmem:[%s3 + $0xe4] sm:$0xf]
  %v348 = vld [vmem:[%s3 + $0xe8] sm:$0xf]
  %v349 = vld [vmem:[%s3 + $0xec] sm:$0xf]
  %v350 = vld [vmem:[%s3 + $0xf0] sm:$0xf]
  %v351 = vld [vmem:[%s3 + $0xf4] sm:$0xf]
  %v352 = vld [vmem:[%s3 + $0xf8] sm:$0xf]
  %v353 = vld [vmem:[%s3 + $0xfc] sm:$0xf]
  %v354 = vld [vmem:[%s3 + $0x100] sm:$0xf]
  %v355 = vld [vmem:[%s3 + $0x104] sm:$0xf]
  %v356 = vld [vmem:[%s3 + $0x108] sm:$0xf]
  %v357 = vld [vmem:[%s3 + $0x10c] sm:$0xf]
  %v358 = vld [vmem:[%s3 + $0x110] sm:$0xf]
  %v359 = vld [vmem:[%s3 + $0x114] sm:$0xf]
  %v360 = vld [vmem:[%s3 + $0x118] sm:$0xf]
  %v361 = vld [vmem:[%s3 + $0x11c] sm:$0xf]
  %v362 = vld [vmem:[%s3 + $0x120] sm:$0xf]
  %v363 = vld [vmem:[%s3 + $0x124] sm:$0xf]
  %v364 = vld [vmem:[%s3 + $0x128] sm:$0xf]
  %v365 = vld [vmem:[%s3 + $0x12c] sm:$0xf]
  %v366 = vld [vmem:[%s3 + $0x130] sm:$0xf]
  %v367 = vld [vmem:[%s3 + $0x134] sm:$0xf]
  %v368 = vld [vmem:[%s3 + $0x138] sm:$0xf]
  %v369 = vld [vmem:[%s3 + $0x13c] sm:$0xf]
  %v370 = vld [vmem:[%s3 + $0x140] sm:$0xf]
  %v371 = vld [vmem:[%s3 + $0x144] sm:$0xf]
  %v372 = vld [vmem:[%s3 + $0x148] sm:$0xf]
  %v373 = vld [vmem:[%s3 + $0x14c] sm:$0xf]
  %v374 = vld [vmem:[%s3 + $0x150] sm:$0xf]
  %v375 = vld [vmem:[%s3 + $0x154] sm:$0xf]
  %v376 = vld [vmem:[%s3 + $0x158] sm:$0xf]
  %v377 = vld [vmem:[%s3 + $0x15c] sm:$0xf]
  %v378 = vld [vmem:[%s3 + $0x160] sm:$0xf]
  %v379 = vld [vmem:[%s3 + $0x164] sm:$0xf]
  %v380 = vld [vmem:[%s3 + $0x168] sm:$0xf]
  %v381 = vld [vmem:[%s3 + $0x16c] sm:$0xf]
  %v382 = vld [vmem:[%s3 + $0x170] sm:$0xf]
  %v383 = vld [vmem:[%s3 + $0x174] sm:$0xf]
  %v384 = vld [vmem:[%s3 + $0x178] sm:$0xf]
  %v385 = vld [vmem:[%s3 + $0x17c] sm:$0xf]
  %v386 = vld [vmem:[%s3 + $0x180] sm:$0xf]
  %v387 = vld [vmem:[%s3 + $0x184] sm:$0xf]
  %v388 = vld [vmem:[%s3 + $0x188] sm:$0xf]
  %v389 = vld [vmem:[%s3 + $0x18c] sm:$0xf]
  %v390 = vld [vmem:[%s3 + $0x190] sm:$0xf]
  %v391 = vld [vmem:[%s3 + $0x194] sm:$0xf]
  %v392 = vld [vmem:[%s3 + $0x198] sm:$0xf]
  %v393 = vld [vmem:[%s3 + $0x19c] sm:$0xf]
  %v394 = vld [vmem:[%s3 + $0x1a0] sm:$0xf]
  %v395 = vld [vmem:[%s3 + $0x1a4] sm:$0xf]
  %v396 = vld [vmem:[%s3 + $0x1a8] sm:$0xf]
  %v397 = vld [vmem:[%s3 + $0x1ac] sm:$0xf]
  %v398 = vld [vmem:[%s3 + $0x1b0] sm:$0xf]
  %v399 = vld [vmem:[%s3 + $0x1b4] sm:$0xf]
  %v400 = vld [vmem:[%s3 + $0x1b8] sm:$0xf]
  %v401 = vld [vmem:[%s3 + $0x1bc] sm:$0xf]
  %v514 = vunpack.c.l.b16 %v290
  %v515 = vunpack.c.l.b16 %v291
  %v516 = vunpack.c.l.b16 %v292
  %v517 = vunpack.c.l.b16 %v293
  %v518 = vunpack.c.l.b16 %v294
  %v519 = vunpack.c.l.b16 %v295
  %v520 = vunpack.c.l.b16 %v296
  %v521 = vunpack.c.l.b16 %v297
  %v522 = vunpack.c.l.b16 %v298
  %v523 = vunpack.c.l.b16 %v299
  %v524 = vunpack.c.l.b16 %v300
  %v525 = vunpack.c.l.b16 %v301
  %v526 = vunpack.c.l.b16 %v302
  %v527 = vunpack.c.l.b16 %v303
  %v528 = vunpack.c.l.b16 %v304
  %v529 = vunpack.c.l.b16 %v305
  %v530 = vunpack.c.l.b16 %v306
  %v531 = vunpack.c.l.b16 %v307
  %v532 = vunpack.c.l.b16 %v308
  %v533 = vunpack.c.l.b16 %v309
  %v534 = vunpack.c.l.b16 %v310
  %v535 = vunpack.c.l.b16 %v311
  %v536 = vunpack.c.l.b16 %v312
  %v537 = vunpack.c.l.b16 %v313
  %v538 = vunpack.c.l.b16 %v314
  %v539 = vunpack.c.l.b16 %v315
  %v540 = vunpack.c.l.b16 %v316
  %v541 = vunpack.c.l.b16 %v317
  %v542 = vunpack.c.l.b16 %v318
  %v543 = vunpack.c.l.b16 %v319
  %v544 = vunpack.c.l.b16 %v320
  %v545 = vunpack.c.l.b16 %v321
  %v546 = vunpack.c.l.b16 %v322
  %v547 = vunpack.c.l.b16 %v323
  %v548 = vunpack.c.l.b16 %v324
  %v549 = vunpack.c.l.b16 %v325
  %v550 = vunpack.c.l.b16 %v326
  %v551 = vunpack.c.l.b16 %v327
  %v552 = vunpack.c.l.b16 %v328
  %v553 = vunpack.c.l.b16 %v329
  %v554 = vunpack.c.l.b16 %v330
  %v555 = vunpack.c.l.b16 %v331
  %v556 = vunpack.c.l.b16 %v332
  %v557 = vunpack.c.l.b16 %v333
  %v558 = vunpack.c.l.b16 %v334
  %v559 = vunpack.c.l.b16 %v335
  %v560 = vunpack.c.l.b16 %v336
  %v561 = vunpack.c.l.b16 %v337
  %v562 = vunpack.c.l.b16 %v338
  %v563 = vunpack.c.l.b16 %v339
  %v564 = vunpack.c.l.b16 %v340
  %v565 = vunpack.c.l.b16 %v341
  %v566 = vunpack.c.l.b16 %v342
  %v567 = vunpack.c.l.b16 %v343
  %v568 = vunpack.c.l.b16 %v344
  %v569 = vunpack.c.l.b16 %v345
  %v570 = vunpack.c.l.b16 %v346
  %v571 = vunpack.c.l.b16 %v347
  %v572 = vunpack.c.l.b16 %v348
  %v573 = vunpack.c.l.b16 %v349
  %v574 = vunpack.c.l.b16 %v350
  %v575 = vunpack.c.l.b16 %v351
  %v576 = vunpack.c.l.b16 %v352
  %v577 = vunpack.c.l.b16 %v353
  %v578 = vunpack.c.l.b16 %v354
  %v579 = vunpack.c.l.b16 %v355
  %v580 = vunpack.c.l.b16 %v356
  %v581 = vunpack.c.l.b16 %v357
  %v582 = vunpack.c.l.b16 %v358
  %v583 = vunpack.c.l.b16 %v359
  %v584 = vunpack.c.l.b16 %v360
  %v585 = vunpack.c.l.b16 %v361
  %v586 = vunpack.c.l.b16 %v362
  %v587 = vunpack.c.l.b16 %v363
  %v588 = vunpack.c.l.b16 %v364
  %v589 = vunpack.c.l.b16 %v365
  %v590 = vunpack.c.l.b16 %v366
  %v591 = vunpack.c.l.b16 %v367
  %v592 = vunpack.c.l.b16 %v368
  %v593 = vunpack.c.l.b16 %v369
  %v594 = vunpack.c.l.b16 %v370
  %v595 = vunpack.c.l.b16 %v371
  %v596 = vunpack.c.l.b16 %v372
  %v597 = vunpack.c.l.b16 %v373
  %v598 = vunpack.c.l.b16 %v374
  %v599 = vunpack.c.l.b16 %v375
  %v600 = vunpack.c.l.b16 %v376
  %v601 = vunpack.c.l.b16 %v377
  %v602 = vunpack.c.l.b16 %v378
  %v603 = vunpack.c.l.b16 %v379
  %v604 = vunpack.c.l.b16 %v380
  %v605 = vunpack.c.l.b16 %v381
  %v606 = vunpack.c.l.b16 %v382
  %v607 = vunpack.c.l.b16 %v383
  %v608 = vunpack.c.l.b16 %v384
  %v609 = vunpack.c.l.b16 %v385
  %v610 = vunpack.c.l.b16 %v386
  %v611 = vunpack.c.l.b16 %v387
  %v612 = vunpack.c.l.b16 %v388
  %v613 = vunpack.c.l.b16 %v389
  %v614 = vunpack.c.l.b16 %v390
  %v615 = vunpack.c.l.b16 %v391
  %v616 = vunpack.c.l.b16 %v392
  %v617 = vunpack.c.l.b16 %v393
  %v618 = vunpack.c.l.b16 %v394
  %v619 = vunpack.c.l.b16 %v395
  %v620 = vunpack.c.l.b16 %v396
  %v621 = vunpack.c.l.b16 %v397
  %v622 = vunpack.c.l.b16 %v398
  %v623 = vunpack.c.l.b16 %v399
  %v624 = vunpack.c.l.b16 %v400
  %v625 = vunpack.c.l.b16 %v401
  %v626 = vpack.c.b16 %v515, %v514
  %v627 = vpack.c.b16 %v517, %v516
  %v628 = vpack.c.b16 %v519, %v518
  %v629 = vpack.c.b16 %v521, %v520
  %v630 = vpack.c.b16 %v523, %v522
  %v631 = vpack.c.b16 %v525, %v524
  %v632 = vpack.c.b16 %v527, %v526
  %v633 = vpack.c.b16 %v529, %v528
  %v634 = vpack.c.b16 %v531, %v530
  %v635 = vpack.c.b16 %v533, %v532
  %v636 = vpack.c.b16 %v535, %v534
  %v637 = vpack.c.b16 %v537, %v536
  %v638 = vpack.c.b16 %v539, %v538
  %v639 = vpack.c.b16 %v541, %v540
  %v640 = vpack.c.b16 %v543, %v542
  %v641 = vpack.c.b16 %v545, %v544
  %v642 = vpack.c.b16 %v547, %v546
  %v643 = vpack.c.b16 %v549, %v548
  %v644 = vpack.c.b16 %v551, %v550
  %v645 = vpack.c.b16 %v553, %v552
  %v646 = vpack.c.b16 %v555, %v554
  %v647 = vpack.c.b16 %v557, %v556
  %v648 = vpack.c.b16 %v559, %v558
  %v649 = vpack.c.b16 %v561, %v560
  %v650 = vpack.c.b16 %v563, %v562
  %v651 = vpack.c.b16 %v565, %v564
  %v652 = vpack.c.b16 %v567, %v566
  %v653 = vpack.c.b16 %v569, %v568
  %v654 = vpack.c.b16 %v571, %v570
  %v655 = vpack.c.b16 %v573, %v572
  %v656 = vpack.c.b16 %v575, %v574
  %v657 = vpack.c.b16 %v577, %v576
  %v658 = vpack.c.b16 %v579, %v578
  %v659 = vpack.c.b16 %v581, %v580
  %v660 = vpack.c.b16 %v583, %v582
  %v661 = vpack.c.b16 %v585, %v584
  %v662 = vpack.c.b16 %v587, %v586
  %v663 = vpack.c.b16 %v589, %v588
  %v664 = vpack.c.b16 %v591, %v590
  %v665 = vpack.c.b16 %v593, %v592
  %v666 = vpack.c.b16 %v595, %v594
  %v667 = vpack.c.b16 %v597, %v596
  %v668 = vpack.c.b16 %v599, %v598
  %v669 = vpack.c.b16 %v601, %v600
  %v670 = vpack.c.b16 %v603, %v602
  %v671 = vpack.c.b16 %v605, %v604
  %v672 = vpack.c.b16 %v607, %v606
  %v673 = vpack.c.b16 %v609, %v608
  %v674 = vpack.c.b16 %v611, %v610
  %v675 = vpack.c.b16 %v613, %v612
  %v676 = vpack.c.b16 %v615, %v614
  %v677 = vpack.c.b16 %v617, %v616
  %v678 = vpack.c.b16 %v619, %v618
  %v679 = vpack.c.b16 %v621, %v620
  %v680 = vpack.c.b16 %v623, %v622
  %v681 = vpack.c.b16 %v625, %v624
  %738 = vmatprep.subr.bf16.mxu0 0
  %739 = vmatpush1.bf16.msra.mxu0 %v626
  %740 = vmatprep.subr.bf16.mxu0 0
  %741 = vmatpush1.bf16.msra.mxu0 %v627
  %742 = vmatprep.subr.bf16.mxu0 0
  %743 = vmatpush1.bf16.msra.mxu0 %v628
  %744 = vmatprep.subr.bf16.mxu0 0
  %745 = vmatpush1.bf16.msra.mxu0 %v629
  %746 = vmatprep.subr.bf16.mxu0 0
  %747 = vmatpush1.bf16.msra.mxu0 %v630
  %748 = vmatprep.subr.bf16.mxu0 0
  %749 = vmatpush1.bf16.msra.mxu0 %v631
  %750 = vmatprep.subr.bf16.mxu0 0
  %751 = vmatpush1.bf16.msra.mxu0 %v632
  %752 = vmatprep.subr.bf16.mxu0 0
  %753 = vmatpush1.bf16.msra.mxu0 %v633
  %754 = vmatprep.subr.bf16.mxu0 0
  %755 = vmatpush1.bf16.msra.mxu0 %v634
  %756 = vmatprep.subr.bf16.mxu0 0
  %757 = vmatpush1.bf16.msra.mxu0 %v635
  %758 = vmatprep.subr.bf16.mxu0 0
  %759 = vmatpush1.bf16.msra.mxu0 %v636
  %760 = vmatprep.subr.bf16.mxu0 0
  %761 = vmatpush1.bf16.msra.mxu0 %v637
  %762 = vmatprep.subr.bf16.mxu0 0
  %763 = vmatpush1.bf16.msra.mxu0 %v638
  %764 = vmatprep.subr.bf16.mxu0 0
  %765 = vmatpush1.bf16.msra.mxu0 %v639
  %766 = vmatprep.subr.bf16.mxu0 0
  %767 = vmatpush1.bf16.msra.mxu0 %v640
  %768 = vmatprep.subr.bf16.mxu0 0
  %769 = vmatpush1.bf16.msra.mxu0 %v641
  %770 = vmatprep.mubr.bf16.mxu0 %v284
  %771 = vmatmul.mubr.bf16.gmra.mrb[0].mxu0 %v283
  %v772 = vpop.f32.mrb[0].mxu0
  %v773 = vadd.f32 0.0, %v772
  %v774 = vpop.f32.mrb[0].mxu0
  %v775 = vpop.f32.mrb[0].mxu0
  %v776 = vpop.f32.mrb[0].mxu0
  %777 = vdwg.mxu0
  %778 = vmatprep.subr.bf16.mxu0 0
  %779 = vmatpush1.bf16.msra.mxu0 %v642
  %780 = vmatprep.subr.bf16.mxu0 0
  %781 = vmatpush1.bf16.msra.mxu0 %v643
  %782 = vmatprep.subr.bf16.mxu0 0
  %783 = vmatpush1.bf16.msra.mxu0 %v644
  %784 = vmatprep.subr.bf16.mxu0 0
  %785 = vmatpush1.bf16.msra.mxu0 %v645
  %786 = vmatprep.subr.bf16.mxu0 0
  %787 = vmatpush1.bf16.msra.mxu0 %v646
  %788 = vmatprep.subr.bf16.mxu0 0
  %789 = vmatpush1.bf16.msra.mxu0 %v647
  %790 = vmatprep.subr.bf16.mxu0 0
  %791 = vmatpush1.bf16.msra.mxu0 %v648
  %792 = vmatprep.subr.bf16.mxu0 0
  %793 = vmatpush1.bf16.msra.mxu0 %v649
  %794 = vmatprep.subr.bf16.mxu0 0
  %795 = vmatpush1.bf16.msra.mxu0 %v650
  %796 = vmatprep.subr.bf16.mxu0 0
  %797 = vmatpush1.bf16.msra.mxu0 %v651
  %798 = vmatprep.subr.bf16.mxu0 0
  %799 = vmatpush1.bf16.msra.mxu0 %v652
  %800 = vmatprep.subr.bf16.mxu0 0
  %801 = vmatpush1.bf16.msra.mxu0 %v653
  %802 = vmatprep.subr.bf16.mxu0 0
  %803 = vmatpush1.bf16.msra.mxu0 %v654
  %804 = vmatprep.subr.bf16.mxu0 0
  %805 = vmatpush1.bf16.msra.mxu0 %v655
  %806 = vmatprep.subr.bf16.mxu0 0
  %807 = vmatpush1.bf16.msra.mxu0 %v656
  %808 = vmatprep.subr.bf16.mxu0 0
  %809 = vmatpush1.bf16.msra.mxu0 %v657
  %810 = vmatprep.mubr.bf16.mxu0 %v286
  %811 = vmatmul.mubr.bf16.gmra.mrb[0].mxu0 %v285
  %v812 = vpop.f32.mrb[0].mxu0
  %v813 = vadd.f32 %v773, %v812
  %v814 = vpop.f32.mrb[0].mxu0
  %v815 = vpop.f32.mrb[0].mxu0
  %v816 = vpop.f32.mrb[0].mxu0
  %817 = vdwg.mxu0
  %818 = vmatprep.subr.bf16.mxu0 0
  %819 = vmatpush1.bf16.msra.mxu0 %v658
  %820 = vmatprep.subr.bf16.mxu0 0
  %821 = vmatpush1.bf16.msra.mxu0 %v659
  %822 = vmatprep.subr.bf16.mxu0 0
  %823 = vmatpush1.bf16.msra.mxu0 %v660
  %824 = vmatprep.subr.bf16.mxu0 0
  %825 = vmatpush1.bf16.msra.mxu0 %v661
  %826 = vmatprep.subr.bf16.mxu0 0
  %827 = vmatpush1.bf16.msra.mxu0 %v662
  %828 = vmatprep.subr.bf16.mxu0 0
  %829 = vmatpush1.bf16.msra.mxu0 %v663
  %830 = vmatprep.subr.bf16.mxu0 0
  %831 = vmatpush1.bf16.msra.mxu0 %v664
  %832 = vmatprep.subr.bf16.mxu0 0
  %833 = vmatpush1.bf16.msra.mxu0 %v665
  %834 = vmatprep.subr.bf16.mxu0 0
  %835 = vmatpush1.bf16.msra.mxu0 %v666
  %836 = vmatprep.subr.bf16.mxu0 0
  %837 = vmatpush1.bf16.msra.mxu0 %v667
  %838 = vmatprep.subr.bf16.mxu0 0
  %839 = vmatpush1.bf16.msra.mxu0 %v668
  %840 = vmatprep.subr.bf16.mxu0 0
  %841 = vmatpush1.bf16.msra.mxu0 %v669
  %842 = vmatprep.subr.bf16.mxu0 0
  %843 = vmatpush1.bf16.msra.mxu0 %v670
  %844 = vmatprep.subr.bf16.mxu0 0
  %845 = vmatpush1.bf16.msra.mxu0 %v671
  %846 = vmatprep.subr.bf16.mxu0 0
  %847 = vmatpush1.bf16.msra.mxu0 %v672
  %848 = vmatprep.subr.bf16.mxu0 0
  %849 = vmatpush1.bf16.msra.mxu0 %v673
  %850 = vmatprep.mubr.bf16.mxu0 %v288
  %851 = vmatmul.mubr.bf16.gmra.mrb[0].mxu0 %v287
  %v852 = vpop.f32.mrb[0].mxu0
  %v853 = vadd.f32 %v813, %v852
  %v854 = vpop.f32.mrb[0].mxu0
  %v855 = vpop.f32.mrb[0].mxu0
  %v856 = vpop.f32.mrb[0].mxu0
  %857 = vdwg.mxu0
  %858 = vmatprep.subr.bf16.mxu0 0
  %859 = vmatpush1.bf16.msra.mxu0 %v674
  %860 = vmatprep.subr.bf16.mxu0 0
  %861 = vmatpush1.bf16.msra.mxu0 %v675
  %862 = vmatprep.subr.bf16.mxu0 0
  %863 = vmatpush1.bf16.msra.mxu0 %v676
  %864 = vmatprep.subr.bf16.mxu0 0
  %865 = vmatpush1.bf16.msra.mxu0 %v677
  %866 = vmatprep.subr.bf16.mxu0 0
  %867 = vmatpush1.bf16.msra.mxu0 %v678
  %868 = vmatprep.subr.bf16.mxu0 0
  %869 = vmatpush1.bf16.msra.mxu0 %v679
  %870 = vmatprep.subr.bf16.mxu0 0
  %871 = vmatpush1.bf16.msra.mxu0 %v680
  %872 = vmatprep.subr.bf16.mxu0 0
  %873 = vmatpush1.bf16.msra.mxu0 %v681
  %874 = vmatprep.subr.bf16.mxu0 0
  %875 = vmatpush1.bf16.msra.mxu0 0
  %876 = vmatprep.subr.bf16.mxu0 0
  %877 = vmatpush1.bf16.msra.mxu0 0
  %878 = vmatprep.subr.bf16.mxu0 0
  %879 = vmatpush1.bf16.msra.mxu0 0
  %880 = vmatprep.subr.bf16.mxu0 0
  %881 = vmatpush1.bf16.msra.mxu0 0
  %882 = vmatprep.subr.bf16.mxu0 0
  %883 = vmatpush1.bf16.msra.mxu0 0
  %884 = vmatprep.subr.bf16.mxu0 0
  %885 = vmatpush1.bf16.msra.mxu0 0
  %886 = vmatprep.subr.bf16.mxu0 0
  %887 = vmatpush1.bf16.msra.mxu0 0
  %888 = vmatprep.subr.bf16.mxu0 0
  %889 = vmatpush1.bf16.msra.mxu0 0
  %890 = vmatprep.mubr.bf16.mxu0 0
  %891 = vmatmul.mubr.bf16.gmra.mrb[0].mxu0 %v289
  %v892 = vpop.f32.mrb[0].mxu0
  %v893 = vadd.f32 %v853, %v892
  %v894 = vpop.f32.mrb[0].mxu0
  %v895 = vpop.f32.mrb[0].mxu0
  %v896 = vpop.f32.mrb[0].mxu0
  %897 = vdwg.mxu0
  %v898 = vadd.f32 %v282, %v893
  %899 = vst [vmem:[#allocation2] sm:$0xff] %v898
  // Predicated region
  $region26: #{mlp_forward.1} parent=0 // pred_check
    %p900 = pneg %p21
  $region27: #{mlp_forward.1} parent=0 // pred_check_branch
    %902 = sbr.rel (%p900) target = $region29
  $region28: #{mlp_forward.1} parent=0 // pred_region
    %v903 = vld [vmem:[#allocation2] sm:$0xff]
    %v904 = vld [vmem:[%s4] sm:$0x1]
    %v906 = vlaneseq
    %v907 = vshrl.u32 %v906, 7
    %v908 = vsub.s32 0, %v907
    %v909 = vrot.slane %v904, %v908
    %v911 = vadd.f32 %v903, %v909
    %912 = vst [vmem:[%s5] sm:$0xff] %v911
  $region29: #{mlp_forward.1} parent=0 // pred_fallthru
    _
  // Predicated region
  $region30: #{mlp_forward.1} parent=0 // pred_check
    _
  $region31: #{mlp_forward.1} parent=0 // pred_check_branch
    %914 = sbr.rel (0) target = $region33
  $region32: #{mlp_forward.1} parent=0 // pred_region
    _
  $region33: #{mlp_forward.1} parent=0 // pred_fallthru
    _
  // Predicated region
  $region34: #{mlp_forward.1} parent=0 // pred_check
    _
  $region35: #{mlp_forward.1} parent=0 // pred_check_branch
    %916 = sbr.rel (0) target = $region37
  $region36: #{mlp_forward.1} parent=0 // pred_region
    _
  $region37: #{mlp_forward.1} parent=0 // pred_fallthru
    _

</llo_original>
